<compile_context>
chip_gen: v5e
topology: v5e:2x2
jax: 0.10.0
libtpu: 0.0.40
codegen_flags: <defaults>
</compile_context>

<pallas_src>
import functools

import jax
import jax.numpy as jnp
from jax import lax
from jax.experimental import pallas as pl
from jax.experimental.pallas import tpu as pltpu

_LANE = 128


def _pointwise_conv_kernel(x_ref, w_ref, b_ref, o_ref):
    """1x1 conv over channels + bias.

    x_ref: (C_in, TN)   -- channels on sublanes, lane-dense spatial tile
    w_ref: (C_out, C_in)
    b_ref: (C_out, 1)   -- f32
    o_ref: (C_out, TN)
    """
    acc = jnp.dot(
        w_ref[...],
        x_ref[...],
        preferred_element_type=jnp.float32,
        precision=lax.Precision.HIGHEST,
    )
    o_ref[...] = (acc + b_ref[...]).astype(o_ref.dtype)


def _choose_spatial_tile(n: int, batch: int) -> int:
    """Pick a lane-dense spatial tile TN.

    - Multiple of 128 where possible so output stores are unmasked vst's.
    - Large (up to 8192) to amortize the ~0.35us per-grid-step overhead, but
      capped so the 2x double-buffered (C_in + C_out) x TN blocks stay around
      ~10 MiB f32: fits the default scoped-VMEM limit on v5e (16 MiB) and
      leaves headroom on v7x (32 MiB scoped of 64 MiB physical).
    - Keeps >= 2 parallel grid steps when possible so megacore / both v7x
      TensorCores get work.
    """
    cap = 8192
    if n <= 2 * _LANE:
        return n  # full-extent block (legal even when not a multiple of 128)
    tn = min(cap, (n // _LANE) * _LANE)
    if batch == 1 and tn >= n:
        # Split the only spatial block in two so the parallel grid has >= 2 steps.
        half = (-(-((n + 1) // 2) // _LANE)) * _LANE
        tn = max(_LANE, min(tn, half))
    return tn


def patch_unembed_forward(x, weight, bias, *, patch_size):
    """PatchUnEmbed forward (kernel_size=1 path).

    x      : (B, C_in, H, W)
    weight : (C_out, C_in)   1x1 conv kernel squeezed from (C_out, C_in, 1, 1)
    bias   : (C_out,)
    returns: (B, C_out // patch_size**2, H*patch_size, W*patch_size)
    """
    B, C_in, H, W = x.shape
    C_out = weight.shape[0]
    r = patch_size
    assert C_out % (r * r) == 0, "C_out must be out_chans * patch_size**2"
    # TODO(synk): general kernel_size > 1 with reflect padding is not
    # implemented (the module default is kernel_size=1, handled here).

    N = H * W
    TN = _choose_spatial_tile(N, B)
    grid = (B, pl.cdiv(N, TN))

    x_flat = x.reshape(B, C_in, N)                 # contiguous reshape, free
    w2d = weight.astype(x.dtype)
    b2d = bias.astype(jnp.float32).reshape(C_out, 1)

    # Per-step VMEM: double-buffered x/out blocks + resident weight/bias.
    itemsize = jnp.dtype(x.dtype).itemsize
    vmem_bytes = (
        2 * (C_in + C_out) * TN * itemsize
        + C_out * C_in * itemsize
        + C_out * 4
        + (1 << 20)
    )

    y_flat = pl.pallas_call(
        _pointwise_conv_kernel,
        out_shape=jax.ShapeDtypeStruct((B, C_out, N), x.dtype),
        grid=grid,
        in_specs=[
            # activations: squeeze batch, full C_in on sublanes, TN lanes
            pl.BlockSpec((None, C_in, TN), lambda b, n: (b, 0, n)),
            # weight / bias: constant block index -> fetched once, stays resident
            pl.BlockSpec((C_out, C_in), lambda b, n: (0, 0)),
            pl.BlockSpec((C_out, 1), lambda b, n: (0, 0)),
        ],
        out_specs=pl.BlockSpec((None, C_out, TN), lambda b, n: (b, 0, n)),
        compiler_params=pltpu.CompilerParams(
            dimension_semantics=("parallel", "parallel"),
            vmem_limit_bytes=int(max(vmem_bytes, 32 * 1024 * 1024)),
        ),
    )(x_flat, w2d, b2d)

    # PixelShuffle(patch_size): pure layout change, one XLA transpose pass.
    oc = C_out // (r * r)
    y = y_flat.reshape(B, oc, r, r, H, W)
    y = jnp.transpose(y, (0, 1, 4, 2, 5, 3))
    return y.reshape(B, oc, H * r, W * r)


if __name__ == "__main__":
    # Module defaults: patch_size=4, out_chans=3, embed_dim=96, kernel_size=1.
    B, embed_dim, H, W = 2, 96, 16, 16
    patch_size, out_chans = 4, 3
    C_out = out_chans * patch_size ** 2  # 48

    key = jax.random.PRNGKey(0)
    kx, kw, kb = jax.random.split(key, 3)
    x = jax.random.normal(kx, (B, embed_dim, H, W), dtype=jnp.float32)
    w = jax.random.normal(kw, (C_out, embed_dim), dtype=jnp.float32) * 0.05
    b = jax.random.normal(kb, (C_out,), dtype=jnp.float32) * 0.05

    fwd = jax.jit(functools.partial(patch_unembed_forward, patch_size=patch_size))
    out = jax.block_until_ready(fwd(x, w, b))

    # Pure-JAX reference: 1x1 conv + bias, then PixelShuffle.
    y_ref = jnp.einsum(
        "oi,bihw->bohw", w, x, precision=lax.Precision.HIGHEST
    ) + b[None, :, None, None]
    ref = y_ref.reshape(B, out_chans, patch_size, patch_size, H, W)
    ref = jnp.transpose(ref, (0, 1, 4, 2, 5, 3)).reshape(
        B, out_chans, H * patch_size, W * patch_size
    )

    assert out.shape == (B, out_chans, H * patch_size, W * patch_size), out.shape
    max_err = float(jnp.max(jnp.abs(out - ref)))
    assert max_err < 1e-2, f"max abs error {max_err}"
    print("KERNEL_OK")
</pallas_src>

<mosaic_0001>
module attributes {stable_mosaic.version = 11 : i64} {
  func.func @_pointwise_conv_kernel(%arg0: i32, %arg1: i32, %arg2: memref<1x96x256xf32, #tpu.memory_space<vmem>>, %arg3: memref<48x96xf32, #tpu.memory_space<vmem>>, %arg4: memref<48x1xf32, #tpu.memory_space<vmem>>, %arg5: memref<1x48x256xf32, #tpu.memory_space<vmem>>) attributes {dimension_semantics = [#tpu.dimension_semantics<parallel>, #tpu.dimension_semantics<parallel>], iteration_bounds = array<i64: 2, 1>, scalar_prefetch = 0 : i64, scratch_operands = 0 : i64, tpu.core_type = #tpu.core_type<tc>, window_params = [{transform_indices = @transform_0, window_bounds = array<i64: 1, 96, 256>}, {pipeline_mode = #tpu.pipeline_mode<synchronous>, transform_indices = @transform_1, window_bounds = array<i64: 48, 96>}, {pipeline_mode = #tpu.pipeline_mode<synchronous>, transform_indices = @transform_2, window_bounds = array<i64: 48, 1>}, {transform_indices = @transform_3, window_bounds = array<i64: 1, 48, 256>}]} {
    %c0 = arith.constant 0 : index
    %c0_0 = arith.constant 0 : index
    %0 = vector.load %arg3[%c0, %c0_0] : memref<48x96xf32, #tpu.memory_space<vmem>>, vector<48x96xf32>
    %c0_1 = arith.constant 0 : index
    %c0_2 = arith.constant 0 : index
    %c0_3 = arith.constant 0 : index
    %1 = vector.load %arg2[%c0_1, %c0_2, %c0_3] : memref<1x96x256xf32, #tpu.memory_space<vmem>>, vector<1x96x256xf32>
    %2 = vector.shape_cast %1 : vector<1x96x256xf32> to vector<96x256xf32>
    %cst = arith.constant dense<0.000000e+00> : vector<48x256xf32>
    %3 = tpu.matmul %0, %2, %cst {dimension_numbers = #tpu.dot_dimension_numbers<[1], [0], [0], [1], [0, 0, 1, 1], [], []>, precision = #tpu.contract_precision<fp32>} : vector<48x96xf32>, vector<96x256xf32>, vector<48x256xf32> -> vector<48x256xf32>
    %c0_4 = arith.constant 0 : index
    %c0_5 = arith.constant 0 : index
    %4 = vector.load %arg4[%c0_4, %c0_5] : memref<48x1xf32, #tpu.memory_space<vmem>>, vector<48x1xf32>
    %5 = vector.broadcast %4 : vector<48x1xf32> to vector<48x256xf32>
    %6 = arith.addf %3, %5 : vector<48x256xf32>
    %c0_6 = arith.constant 0 : index
    %c0_7 = arith.constant 0 : index
    %c0_8 = arith.constant 0 : index
    %7 = vector.load %arg5[%c0_6, %c0_7, %c0_8] : memref<1x48x256xf32, #tpu.memory_space<vmem>>, vector<1x48x256xf32>
    %8 = vector.shape_cast %7 : vector<1x48x256xf32> to vector<48x256xf32>
    %9 = vector.shape_cast %6 : vector<48x256xf32> to vector<1x48x256xf32>
    tpu.vector_store %arg5[%c0_6, %c0_7, %c0_8], %9 {strides = array<i32>} : memref<1x48x256xf32, #tpu.memory_space<vmem>>, vector<1x48x256xf32>,
    return
  }
  func.func @transform_0(%arg0: i32, %arg1: i32) -> (i32, i32, i32) {
    %c0_i32 = arith.constant 0 : i32
    %c0_i32_0 = arith.constant 0 : i32
    return %arg0, %c0_i32, %arg1 : i32, i32, i32
  }
  func.func @transform_1(%arg0: i32, %arg1: i32) -> (i32, i32) {
    %c0_i32 = arith.constant 0 : i32
    %c0_i32_0 = arith.constant 0 : i32
    %c0_i32_1 = arith.constant 0 : i32
    return %c0_i32, %c0_i32_0 : i32, i32
  }
  func.func @transform_2(%arg0: i32, %arg1: i32) -> (i32, i32) {
    %c0_i32 = arith.constant 0 : i32
    %c0_i32_0 = arith.constant 0 : i32
    %c0_i32_1 = arith.constant 0 : i32
    return %c0_i32, %c0_i32_0 : i32, i32
  }
  func.func @transform_3(%arg0: i32, %arg1: i32) -> (i32, i32, i32) {
    %c0_i32 = arith.constant 0 : i32
    %c0_i32_0 = arith.constant 0 : i32
    return %arg0, %c0_i32, %arg1 : i32, i32, i32
  }
}

</mosaic_0001>

<llo_original>
// kernel: patch_unembed_forward.1
$region0: #{patch_unembed_forward.1}
  #allocation0 [shape = 'u32[]', space=smem, size = 0x4, offset = 0x4, fixed_abs, tag = 'smem constant byte address 0x4 - core index']
  #allocation1 [shape = 'u32[72,128]{1,0:T(1,128)}', space=vmem, size = 0x9000, scoped, tag = 'internal scratch']
  %s0 = inlined_call_operand.vmem [shape: f32[2,96,256], index: 0, kind: input, shape index: {}]
  %s1 = inlined_call_operand.hbm [shape: f32[48,96], index: 1, kind: input, shape index: {}]
  %s2 = inlined_call_operand.vmem [shape: f32[48,1], index: 2, kind: input, shape index: {}]
  %s3 = inlined_call_operand.vmem [shape: f32[2,48,256], index: 3, kind: output, shape index: {}]
  %s4 = sld [smem:[#allocation0]]
  $region49: #{patch_unembed_forward.1} parent=0
    _
  %s6 = ssub.s32 1, %s4
  %s7 = scalar_select 0, %s6, %s4
  $region1: #{patch_unembed_forward.1} parent=0
    #allocation2 [shape = 'u8[24576]{0}', space=vmem, size = 0x6000, scoped, tag = 'input window, operand 1, single buffered']
    #allocation3 [shape = 's32[2]{0}', space=sflag, size = 0x8, scoped, tag = 'scoped memory for patch_unembed_forward.1']
    %8 = vsyncpa [#allocation3], 0
    loop: start=0, step=1, limit=4
    $region2: #{patch_unembed_forward.1} parent=1 // loop_pre_header
      _
    $region3: #{patch_unembed_forward.1} parent=1 // loop_header
      %s10 = sphi 0, %s14
      %p11 = scmp.ge.s32.totalorder %s10, 4
      %s17 = sphi 0, %s29
      %s18 = sphi 0, %s25
      %s19 = sphi 0, %s17
      %s20 = sphi 0, %s18
      %s21 = sphi 0, %s19
      %s22 = sphi 0, %s20
      %s34 = sphi 0, %s36
      %s37 = sphi 0, %s34
      %s38 = sphi 0, %s37
      %s54 = sphi 0, %s38
      %s58 = sphi 0, %s58
      %s60 = sphi 0, %s58
      %s61 = sphi 0, %s60
      %s75 = sphi 0, %s61
      %s79 = sphi 0, %s79
      %s81 = sphi 0, %s79
      %s82 = sphi 0, %s81
      %s96 = sphi 0, %s82
      %s104 = sphi 0, %s106
      %s107 = sphi 0, %s104
      %s108 = sphi 0, %s107
      %s124 = sphi 0, %s108
    $region4: #{patch_unembed_forward.1} parent=1 // loop_header_branch
      %13 = sbr.rel (%p11) target = $region8
    $region5: #{patch_unembed_forward.1} parent=1 // loop_body
      %s15 = ssub.s32 %s10, 1
      %s16 = ssub.s32 %s10, 2
      %s23 = sadd.s32 1, %s18
      %p24 = scmp.ge.s32.totalorder %s23, 1
      %s25 = scalar_select %p24, 0, %s23
      %s26 = sadd.s32 1, %s17
      %s27 = scalar_select %p24, %s26, %s17
      %p28 = scmp.ge.s32.totalorder %s27, 2
      %s29 = scalar_select %p28, 0, %s27
      %s30 = ssub.s32 %s17, %s29
      %s31 = ssub.s32 %s18, %s25
      %s32 = sor.u32 %s30, %s31
      %p33 = scmp.eq.s32.totalorder %s32, 0
      %s35 = sadd.s32 %s34, 1
      %s36 = scalar_select %p33, %s34, %s35
      %p39 = pneg %p33
      %p40 = scmp.eq.s32.totalorder %s10, 1
      %p41 = por %p39, %p40
      %p42 = scmp.ne.s32.totalorder %s34, %s37
      %p43 = scmp.eq.s32.totalorder %s10, 0
      %p44 = por %p42, %p43
      %p45 = scmp.ne.s32.totalorder %s34, %s37
      %p46 = scmp.eq.s32.totalorder %s15, 1
      %p47 = por %p45, %p46
      %p48 = scmp.ne.s32.totalorder %s37, %s38
      %p49 = scmp.eq.s32.totalorder %s15, 0
      %p50 = por %p48, %p49
      %p51 = scmp.ne.s32.totalorder %s37, %s38
      %p52 = scmp.eq.s32.totalorder %s16, 1
      %p53 = por %p51, %p52
      %p55 = scmp.ne.s32.totalorder %s38, %s54
      %p56 = scmp.eq.s32.totalorder %s16, 0
      %p57 = por %p55, %p56
      %s59 = sadd.s32 %s58, 1
      %p62 = scmp.eq.s32.totalorder %s10, 1
      %p63 = scmp.ne.s32.totalorder %s58, %s60
      %p64 = scmp.eq.s32.totalorder %s10, 0
      %p65 = por %p63, %p64
      %p66 = scmp.ne.s32.totalorder %s58, %s60
      %p67 = scmp.eq.s32.totalorder %s15, 1
      %p68 = por %p66, %p67
      %p69 = scmp.ne.s32.totalorder %s60, %s61
      %p70 = scmp.eq.s32.totalorder %s15, 0
      %p71 = por %p69, %p70
      %p72 = scmp.ne.s32.totalorder %s60, %s61
      %p73 = scmp.eq.s32.totalorder %s16, 1
      %p74 = por %p72, %p73
      %p76 = scmp.ne.s32.totalorder %s61, %s75
      %p77 = scmp.eq.s32.totalorder %s16, 0
      %p78 = por %p76, %p77
      %s80 = sadd.s32 %s79, 1
      %p83 = scmp.eq.s32.totalorder %s10, 1
      %p84 = scmp.ne.s32.totalorder %s79, %s81
      %p85 = scmp.eq.s32.totalorder %s10, 0
      %p86 = por %p84, %p85
      %p87 = scmp.ne.s32.totalorder %s79, %s81
      %p88 = scmp.eq.s32.totalorder %s15, 1
      %p89 = por %p87, %p88
      %p90 = scmp.ne.s32.totalorder %s81, %s82
      %p91 = scmp.eq.s32.totalorder %s15, 0
      %p92 = por %p90, %p91
      %p93 = scmp.ne.s32.totalorder %s81, %s82
      %p94 = scmp.eq.s32.totalorder %s16, 1
      %p95 = por %p93, %p94
      %p97 = scmp.ne.s32.totalorder %s82, %s96
      %p98 = scmp.eq.s32.totalorder %s16, 0
      %p99 = por %p97, %p98
      %s100 = ssub.s32 %s17, %s29
      %s101 = ssub.s32 %s18, %s25
      %s102 = sor.u32 %s100, %s101
      %p103 = scmp.eq.s32.totalorder %s102, 0
      %s105 = sadd.s32 %s104, 1
      %s106 = scalar_select %p103, %s104, %s105
      %p109 = pneg %p103
      %p110 = scmp.eq.s32.totalorder %s10, 1
      %p111 = por %p109, %p110
      %p112 = scmp.ne.s32.totalorder %s104, %s107
      %p113 = scmp.eq.s32.totalorder %s10, 0
      %p114 = por %p112, %p113
      %p115 = scmp.ne.s32.totalorder %s104, %s107
      %p116 = scmp.eq.s32.totalorder %s15, 1
      %p117 = por %p115, %p116
      %p118 = scmp.ne.s32.totalorder %s107, %s108
      %p119 = scmp.eq.s32.totalorder %s15, 0
      %p120 = por %p118, %p119
      %p121 = scmp.ne.s32.totalorder %s107, %s108
      %p122 = scmp.eq.s32.totalorder %s16, 1
      %p123 = por %p121, %p122
      %p125 = scmp.ne.s32.totalorder %s108, %s124
      %p126 = scmp.eq.s32.totalorder %s16, 0
      %p127 = por %p125, %p126
      %p128 = scmp.le.s32.totalorder 1, %s10
      %p129 = scmp.lt.s32.totalorder %s10, 3
      %p130 = pnand %p128, %p129
      %p131 = pneg %p130
      // Predicated region
      $region9: #{patch_unembed_forward.1} parent=5 // pred_check
        _
      $region10: #{patch_unembed_forward.1} parent=5 // pred_check_branch
        %133 = sbr.rel (%p130) target = $region12
      $region11: #{patch_unembed_forward.1} parent=5 // pred_region
        %s134 = ssub.s32 %s10, 1
        // Predicated region
        $region13: #{patch_unembed_forward.1} parent=11 // pred_check
          %p135 = pneg %p71
        $region14: #{patch_unembed_forward.1} parent=11 // pred_check_branch
          %137 = sbr.rel (%p135) target = $region16
        $region15: #{patch_unembed_forward.1} parent=11 // pred_region
          %139 = vsyncadd [#allocation3], 0
          %s140 = sshll.u32 %s1, 4
          %s141 = int_to_ptr.hbm [resolvable:$true] %s140
          %s142 = sshll.u32 [#allocation2], 4
          %s143 = int_to_ptr.vmem [resolvable:$true] %s142
          %148 = dma.hbm_to_vmem [thread:$0]  %s141, 768, %s143, [#allocation3], 128, 128, 8
        $region16: #{patch_unembed_forward.1} parent=11 // pred_fallthru
          _
        // Predicated region
        $region17: #{patch_unembed_forward.1} parent=11 // pred_check
          %p149 = pneg %p92
        $region18: #{patch_unembed_forward.1} parent=11 // pred_check_branch
          %151 = sbr.rel (%p149) target = $region20
        $region19: #{patch_unembed_forward.1} parent=11 // pred_region
          _
        $region20: #{patch_unembed_forward.1} parent=11 // pred_fallthru
          _
      $region12: #{patch_unembed_forward.1} parent=5 // pred_fallthru
        _
      %p152 = scmp.lt.s32.totalorder %s10, 2
      // Predicated region
      $region21: #{patch_unembed_forward.1} parent=5 // pred_check
        %p153 = pneg %p152
      $region22: #{patch_unembed_forward.1} parent=5 // pred_check_branch
        %155 = sbr.rel (%p153) target = $region24
      $region23: #{patch_unembed_forward.1} parent=5 // pred_region
        // Predicated region
        $region25: #{patch_unembed_forward.1} parent=23 // pred_check
          %p156 = pneg %p44
        $region26: #{patch_unembed_forward.1} parent=23 // pred_check_branch
          %158 = sbr.rel (%p156) target = $region28
        $region27: #{patch_unembed_forward.1} parent=23 // pred_region
          %s159 = smul.u32 2, %s18
          %p160 = scmp.lt.s32.totalorder %s17, 1
          %s161 = scalar_select %p160, %s17, 1
          %p162 = scmp.lt.s32.totalorder %s159, 1
          %s163 = scalar_select %p162, %s159, 1
          %s164 = smul.addr %s161, 24
          %s165 = sadd.s32 %s163, %s164
          %s166 = smul.addr %s165, 8
          %s167 = scalar_lea.vmem %s0, %s166
          %s168 = smul.u32 2, %s18
        $region28: #{patch_unembed_forward.1} parent=23 // pred_fallthru
          _
      $region24: #{patch_unembed_forward.1} parent=5 // pred_fallthru
        _
      %p169 = scmp.le.s32.totalorder 1, %s10
      %p170 = scmp.lt.s32.totalorder %s10, 3
      %p171 = pnand %p169, %p170
      %p172 = pneg %p171
      // Predicated region
      $region29: #{patch_unembed_forward.1} parent=5 // pred_check
        _
      $region30: #{patch_unembed_forward.1} parent=5 // pred_check_branch
        %174 = sbr.rel (%p171) target = $region32
      $region31: #{patch_unembed_forward.1} parent=5 // pred_region
        %s175 = ssub.s32 %s10, 1
        // Predicated region
        $region33: #{patch_unembed_forward.1} parent=31 // pred_check
          %p176 = pneg %p71
        $region34: #{patch_unembed_forward.1} parent=31 // pred_check_branch
          %178 = sbr.rel (%p176) target = $region36
        $region35: #{patch_unembed_forward.1} parent=31 // pred_region
          %180 = dma.done [#allocation3], 768
        $region36: #{patch_unembed_forward.1} parent=31 // pred_fallthru
          _
        %s181 = smul.u32 2, %s20
        %p182 = scmp.lt.s32.totalorder %s19, 1
        %s183 = scalar_select %p182, %s19, 1
        %p184 = scmp.lt.s32.totalorder %s181, 1
        %s185 = scalar_select %p184, %s181, 1
        %s186 = smul.addr %s183, 24
        %s187 = sadd.s32 %s185, %s186
        %s188 = smul.addr %s187, 8
        %s189 = scalar_lea.vmem %s0, %s188
        %p190 = pneg %p50
        %p191 = pneg %p47
        %p192 = pneg %p71
        %p193 = pneg %p68
        %p194 = pneg %p92
        %p195 = pneg %p89
        %p196 = pneg %p120
        %p197 = pneg %p117
        %s198 = smul.u32 2, %s20
        %p199 = scmp.lt.s32.totalorder %s19, 1
        %s200 = scalar_select %p199, %s19, 1
        %p201 = scmp.lt.s32.totalorder %s198, 1
        %s202 = scalar_select %p201, %s198, 1
        %s203 = smul.addr %s200, 12
        %s204 = sadd.s32 %s202, %s203
        %s205 = smul.addr %s204, 8
        %s206 = scalar_lea.vmem %s3, %s205
        %s207 = smul.u32 2, %s20
        %p208 = scmp.lt.s32.totalorder %s19, 1
        %s209 = scalar_select %p208, %s19, 1
        %p210 = scmp.lt.s32.totalorder %s207, 1
        %s211 = scalar_select %p210, %s207, 1
        %s212 = smul.addr %s209, 24
        %s213 = sadd.s32 %s211, %s212
        %s214 = smul.addr %s213, 8
        %s215 = scalar_lea.vmem %s0, %s214
        %s216 = smul.u32 2, %s20
        %s217 = smul.u32 2, %s20
        %p218 = scmp.lt.s32.totalorder %s19, 1
        %s219 = scalar_select %p218, %s19, 1
        %p220 = scmp.lt.s32.totalorder %s217, 1
        %s221 = scalar_select %p220, %s217, 1
        %s222 = smul.addr %s219, 12
        %s223 = sadd.s32 %s221, %s222
        %s224 = smul.addr %s223, 8
        %s225 = scalar_lea.vmem %s3, %s224
        %s226 = smul.u32 2, %s20
        %v227 = vld [vmem:[#allocation2] sm:$0xff]
        %v228 = vld [vmem:[#allocation2 + $0x8] sm:$0xff]
        %v229 = vld [vmem:[#allocation2 + $0x10] sm:$0xff]
        %v230 = vld [vmem:[#allocation2 + $0x18] sm:$0xff]
        %v231 = vld [vmem:[#allocation2 + $0x20] sm:$0xff]
        %v232 = vld [vmem:[#allocation2 + $0x28] sm:$0xff]
        %v233 = vld [vmem:[%s215] sm:$0xff]
        %v234 = vld [vmem:[%s215 + $0x8] sm:$0xff]
        %v235 = vld [vmem:[%s215 + $0x10] sm:$0xff]
        %v236 = vld [vmem:[%s215 + $0x18] sm:$0xff]
        %v237 = vld [vmem:[%s215 + $0x20] sm:$0xff]
        %v238 = vld [vmem:[%s215 + $0x28] sm:$0xff]
        %v239 = vld [vmem:[%s215 + $0x30] sm:$0xff]
        %v240 = vld [vmem:[%s215 + $0x38] sm:$0xff]
        %v241 = vld [vmem:[%s215 + $0x40] sm:$0xff]
        %v242 = vld [vmem:[%s215 + $0x48] sm:$0xff]
        %v243 = vld [vmem:[%s215 + $0x50] sm:$0xff]
        %v244 = vld [vmem:[%s215 + $0x58] sm:$0xff]
        %v245 = vld [vmem:[%s215 + $0x60] sm:$0xff]
        %v246 = vld [vmem:[%s215 + $0x68] sm:$0xff]
        %v247 = vld [vmem:[%s215 + $0x70] sm:$0xff]
        %v248 = vld [vmem:[%s215 + $0x78] sm:$0xff]
        %v249 = vld [vmem:[%s215 + $0x80] sm:$0xff]
        %v250 = vld [vmem:[%s215 + $0x88] sm:$0xff]
        %v251 = vld [vmem:[%s215 + $0x90] sm:$0xff]
        %v252 = vld [vmem:[%s215 + $0x98] sm:$0xff]
        %v253 = vld [vmem:[%s215 + $0xa0] sm:$0xff]
        %v254 = vld [vmem:[%s215 + $0xa8] sm:$0xff]
        %v255 = vld [vmem:[%s215 + $0xb0] sm:$0xff]
        %v256 = vld [vmem:[%s215 + $0xb8] sm:$0xff]
        %v257 = vld [vmem:[%s2] sm:$0xff]
        %v258 = vld [vmem:[%s2 + $0x8] sm:$0xff]
        %v259 = vld [vmem:[%s2 + $0x10] sm:$0xff]
        %v260 = vld [vmem:[%s2 + $0x18] sm:$0xff]
        %v261 = vld [vmem:[%s2 + $0x20] sm:$0xff]
        %v262 = vld [vmem:[%s2 + $0x28] sm:$0xff]
        %264 = vset.pattern.permute.xlu0 0
        %265 = vperm.xlu0 %264, %v257
        %v266 = vpop.permute.xlu0 %265
        %269 = vset.pattern.permute.xlu0 0
        %270 = vperm.xlu0 %269, %v258
        %v271 = vpop.permute.xlu0 %270
        %274 = vset.pattern.permute.xlu0 0
        %275 = vperm.xlu0 %274, %v259
        %v276 = vpop.permute.xlu0 %275
        %279 = vset.pattern.permute.xlu0 0
        %280 = vperm.xlu0 %279, %v260
        %v281 = vpop.permute.xlu0 %280
        %284 = vset.pattern.permute.xlu0 0
        %285 = vperm.xlu0 %284, %v261
        %v286 = vpop.permute.xlu0 %285
        %289 = vset.pattern.permute.xlu0 0
        %290 = vperm.xlu0 %289, %v262
        %v291 = vpop.permute.xlu0 %290
        %vm293 = vcmask 785408
        %v295 = vsel %vm293, %v227, 0
        %v298 = vsel %vm293, %v228, 0
        %v301 = vsel %vm293, %v229, 0
        %v304 = vsel %vm293, %v230, 0
        %v307 = vsel %vm293, %v231, 0
        %v310 = vsel %vm293, %v232, 0
        %312 = vmatpush.msra.mxu0 0.0
        %313 = vmatpush.msra.mxu0 0.0
        %314 = vmatpush.msra.mxu0 0.0
        %315 = vmatpush.msra.mxu0 0.0
        %v316 = vand.u32 %v255, 4294901760
        %317 = vmatpush.msra.mxu0 %v316
        %v318 = vand.u32 %v253, 4294901760
        %319 = vmatpush.msra.mxu0 %v318
        %v320 = vand.u32 %v251, 4294901760
        %321 = vmatpush.msra.mxu0 %v320
        %v322 = vand.u32 %v249, 4294901760
        %323 = vmatpush.msra.mxu0 %v322
        %v324 = vand.u32 %v247, 4294901760
        %325 = vmatpush.msra.mxu0 %v324
        %v326 = vand.u32 %v245, 4294901760
        %327 = vmatpush.msra.mxu0 %v326
        %v328 = vand.u32 %v243, 4294901760
        %329 = vmatpush.msra.mxu0 %v328
        %v330 = vand.u32 %v241, 4294901760
        %331 = vmatpush.msra.mxu0 %v330
        %v332 = vand.u32 %v239, 4294901760
        %333 = vmatpush.msra.mxu0 %v332
        %v334 = vand.u32 %v237, 4294901760
        %335 = vmatpush.msra.mxu0 %v334
        %v336 = vand.u32 %v235, 4294901760
        %337 = vmatpush.msra.mxu0 %v336
        %v338 = vand.u32 %v233, 4294901760
        %339 = vmatpush.msra.mxu0 %v338
        %v340 = vand.u32 %v295, 4294901760
        %v341 = vsub.f32 %v295, %v340
        %v342 = vand.u32 %v341, 4294901760
        %v343 = vsub.f32 %v341, %v342
        %v344 = vand.u32 %v343, 4294901760
        %345 = vmatmul.f32.gmra.mxu0 %v344
        %v346 = vpop.f32.mrf.mxu0
        %v347 = vadd.f32 %v266, %v346
        %v348 = vand.u32 %v298, 4294901760
        %v349 = vsub.f32 %v298, %v348
        %v350 = vand.u32 %v349, 4294901760
        %v351 = vsub.f32 %v349, %v350
        %v352 = vand.u32 %v351, 4294901760
        %353 = vmatmul.f32.gmra.mxu0 %v352
        %v354 = vpop.f32.mrf.mxu0
        %v355 = vadd.f32 %v271, %v354
        %v356 = vand.u32 %v301, 4294901760
        %v357 = vsub.f32 %v301, %v356
        %v358 = vand.u32 %v357, 4294901760
        %v359 = vsub.f32 %v357, %v358
        %v360 = vand.u32 %v359, 4294901760
        %361 = vmatmul.f32.gmra.mxu0 %v360
        %v362 = vpop.f32.mrf.mxu0
        %v363 = vadd.f32 %v276, %v362
        %v364 = vand.u32 %v304, 4294901760
        %v365 = vsub.f32 %v304, %v364
        %v366 = vand.u32 %v365, 4294901760
        %v367 = vsub.f32 %v365, %v366
        %v368 = vand.u32 %v367, 4294901760
        %369 = vmatmul.f32.gmra.mxu0 %v368
        %v370 = vpop.f32.mrf.mxu0
        %v371 = vadd.f32 %v281, %v370
        %v372 = vand.u32 %v307, 4294901760
        %v373 = vsub.f32 %v307, %v372
        %v374 = vand.u32 %v373, 4294901760
        %v375 = vsub.f32 %v373, %v374
        %v376 = vand.u32 %v375, 4294901760
        %377 = vmatmul.f32.gmra.mxu0 %v376
        %v378 = vpop.f32.mrf.mxu0
        %v379 = vadd.f32 %v286, %v378
        %v380 = vand.u32 %v310, 4294901760
        %v381 = vsub.f32 %v310, %v380
        %v382 = vand.u32 %v381, 4294901760
        %v383 = vsub.f32 %v381, %v382
        %v384 = vand.u32 %v383, 4294901760
        %385 = vmatmul.f32.gmra.mxu0 %v384
        %v386 = vpop.f32.mrf.mxu0
        %v387 = vadd.f32 %v291, %v386
        %388 = vdwg.mxu0
        %389 = vmatpush.msra.mxu0 0.0
        %390 = vmatpush.msra.mxu0 0.0
        %391 = vmatpush.msra.mxu0 0.0
        %392 = vmatpush.msra.mxu0 0.0
        %v393 = vand.u32 %v255, 4294901760
        %v394 = vsub.f32 %v255, %v393
        %v395 = vand.u32 %v394, 4294901760
        %v396 = vsub.f32 %v394, %v395
        %v397 = vand.u32 %v396, 4294901760
        %398 = vmatpush.msra.mxu0 %v397
        %v399 = vand.u32 %v253, 4294901760
        %v400 = vsub.f32 %v253, %v399
        %v401 = vand.u32 %v400, 4294901760
        %v402 = vsub.f32 %v400, %v401
        %v403 = vand.u32 %v402, 4294901760
        %404 = vmatpush.msra.mxu0 %v403
        %v405 = vand.u32 %v251, 4294901760
        %v406 = vsub.f32 %v251, %v405
        %v407 = vand.u32 %v406, 4294901760
        %v408 = vsub.f32 %v406, %v407
        %v409 = vand.u32 %v408, 4294901760
        %410 = vmatpush.msra.mxu0 %v409
        %v411 = vand.u32 %v249, 4294901760
        %v412 = vsub.f32 %v249, %v411
        %v413 = vand.u32 %v412, 4294901760
        %v414 = vsub.f32 %v412, %v413
        %v415 = vand.u32 %v414, 4294901760
        %416 = vmatpush.msra.mxu0 %v415
        %v417 = vand.u32 %v247, 4294901760
        %v418 = vsub.f32 %v247, %v417
        %v419 = vand.u32 %v418, 4294901760
        %v420 = vsub.f32 %v418, %v419
        %v421 = vand.u32 %v420, 4294901760
        %422 = vmatpush.msra.mxu0 %v421
        %v423 = vand.u32 %v245, 4294901760
        %v424 = vsub.f32 %v245, %v423
        %v425 = vand.u32 %v424, 4294901760
        %v426 = vsub.f32 %v424, %v425
        %v427 = vand.u32 %v426, 4294901760
        %428 = vmatpush.msra.mxu0 %v427
        %v429 = vand.u32 %v243, 4294901760
        %v430 = vsub.f32 %v243, %v429
        %v431 = vand.u32 %v430, 4294901760
        %v432 = vsub.f32 %v430, %v431
        %v433 = vand.u32 %v432, 4294901760
        %434 = vmatpush.msra.mxu0 %v433
        %v435 = vand.u32 %v241, 4294901760
        %v436 = vsub.f32 %v241, %v435
        %v437 = vand.u32 %v436, 4294901760
        %v438 = vsub.f32 %v436, %v437
        %v439 = vand.u32 %v438, 4294901760
        %440 = vmatpush.msra.mxu0 %v439
        %v441 = vand.u32 %v239, 4294901760
        %v442 = vsub.f32 %v239, %v441
        %v443 = vand.u32 %v442, 4294901760
        %v444 = vsub.f32 %v442, %v443
        %v445 = vand.u32 %v444, 4294901760
        %446 = vmatpush.msra.mxu0 %v445
        %v447 = vand.u32 %v237, 4294901760
        %v448 = vsub.f32 %v237, %v447
        %v449 = vand.u32 %v448, 4294901760
        %v450 = vsub.f32 %v448, %v449
        %v451 = vand.u32 %v450, 4294901760
        %452 = vmatpush.msra.mxu0 %v451
        %v453 = vand.u32 %v235, 4294901760
        %v454 = vsub.f32 %v235, %v453
        %v455 = vand.u32 %v454, 4294901760
        %v456 = vsub.f32 %v454, %v455
        %v457 = vand.u32 %v456, 4294901760
        %458 = vmatpush.msra.mxu0 %v457
        %v459 = vand.u32 %v233, 4294901760
        %v460 = vsub.f32 %v233, %v459
        %v461 = vand.u32 %v460, 4294901760
        %v462 = vsub.f32 %v460, %v461
        %v463 = vand.u32 %v462, 4294901760
        %464 = vmatpush.msra.mxu0 %v463
        %v465 = vand.u32 %v295, 4294901760
        %466 = vmatmul.f32.gmra.mxu0 %v465
        %v467 = vpop.f32.mrf.mxu0
        %v468 = vadd.f32 %v347, %v467
        %v469 = vand.u32 %v298, 4294901760
        %470 = vmatmul.f32.gmra.mxu0 %v469
        %v471 = vpop.f32.mrf.mxu0
        %v472 = vadd.f32 %v355, %v471
        %v473 = vand.u32 %v301, 4294901760
        %474 = vmatmul.f32.gmra.mxu0 %v473
        %v475 = vpop.f32.mrf.mxu0
        %v476 = vadd.f32 %v363, %v475
        %v477 = vand.u32 %v304, 4294901760
        %478 = vmatmul.f32.gmra.mxu0 %v477
        %v479 = vpop.f32.mrf.mxu0
        %v480 = vadd.f32 %v371, %v479
        %v481 = vand.u32 %v307, 4294901760
        %482 = vmatmul.f32.gmra.mxu0 %v481
        %v483 = vpop.f32.mrf.mxu0
        %v484 = vadd.f32 %v379, %v483
        %v485 = vand.u32 %v310, 4294901760
        %486 = vmatmul.f32.gmra.mxu0 %v485
        %v487 = vpop.f32.mrf.mxu0
        %v488 = vadd.f32 %v387, %v487
        %489 = vdwg.mxu0
        %490 = vmatpush.msra.mxu0 0.0
        %491 = vmatpush.msra.mxu0 0.0
        %492 = vmatpush.msra.mxu0 0.0
        %493 = vmatpush.msra.mxu0 0.0
        %v494 = vand.u32 %v255, 4294901760
        %v495 = vsub.f32 %v255, %v494
        %496 = vmatpush.msra.mxu0 %v495
        %v497 = vand.u32 %v253, 4294901760
        %v498 = vsub.f32 %v253, %v497
        %499 = vmatpush.msra.mxu0 %v498
        %v500 = vand.u32 %v251, 4294901760
        %v501 = vsub.f32 %v251, %v500
        %502 = vmatpush.msra.mxu0 %v501
        %v503 = vand.u32 %v249, 4294901760
        %v504 = vsub.f32 %v249, %v503
        %505 = vmatpush.msra.mxu0 %v504
        %v506 = vand.u32 %v247, 4294901760
        %v507 = vsub.f32 %v247, %v506
        %508 = vmatpush.msra.mxu0 %v507
        %v509 = vand.u32 %v245, 4294901760
        %v510 = vsub.f32 %v245, %v509
        %511 = vmatpush.msra.mxu0 %v510
        %v512 = vand.u32 %v243, 4294901760
        %v513 = vsub.f32 %v243, %v512
        %514 = vmatpush.msra.mxu0 %v513
        %v515 = vand.u32 %v241, 4294901760
        %v516 = vsub.f32 %v241, %v515
        %517 = vmatpush.msra.mxu0 %v516
        %v518 = vand.u32 %v239, 4294901760
        %v519 = vsub.f32 %v239, %v518
        %520 = vmatpush.msra.mxu0 %v519
        %v521 = vand.u32 %v237, 4294901760
        %v522 = vsub.f32 %v237, %v521
        %523 = vmatpush.msra.mxu0 %v522
        %v524 = vand.u32 %v235, 4294901760
        %v525 = vsub.f32 %v235, %v524
        %526 = vmatpush.msra.mxu0 %v525
        %v527 = vand.u32 %v233, 4294901760
        %v528 = vsub.f32 %v233, %v527
        %529 = vmatpush.msra.mxu0 %v528
        %v530 = vand.u32 %v295, 4294901760
        %v531 = vsub.f32 %v295, %v530
        %532 = vmatmul.f32.gmra.mxu0 %v531
        %v533 = vpop.f32.mrf.mxu0
        %v534 = vadd.f32 %v468, %v533
        %v535 = vand.u32 %v298, 4294901760
        %v536 = vsub.f32 %v298, %v535
        %537 = vmatmul.f32.gmra.mxu0 %v536
        %v538 = vpop.f32.mrf.mxu0
        %v539 = vadd.f32 %v472, %v538
        %v540 = vand.u32 %v301, 4294901760
        %v541 = vsub.f32 %v301, %v540
        %542 = vmatmul.f32.gmra.mxu0 %v541
        %v543 = vpop.f32.mrf.mxu0
        %v544 = vadd.f32 %v476, %v543
        %v545 = vand.u32 %v304, 4294901760
        %v546 = vsub.f32 %v304, %v545
        %547 = vmatmul.f32.gmra.mxu0 %v546
        %v548 = vpop.f32.mrf.mxu0
        %v549 = vadd.f32 %v480, %v548
        %v550 = vand.u32 %v307, 4294901760
        %v551 = vsub.f32 %v307, %v550
        %552 = vmatmul.f32.gmra.mxu0 %v551
        %v553 = vpop.f32.mrf.mxu0
        %v554 = vadd.f32 %v484, %v553
        %v555 = vand.u32 %v310, 4294901760
        %v556 = vsub.f32 %v310, %v555
        %557 = vmatmul.f32.gmra.mxu0 %v556
        %v558 = vpop.f32.mrf.mxu0
        %v559 = vadd.f32 %v488, %v558
        %560 = vdwg.mxu0
        %561 = vmatpush.msra.mxu0 0.0
        %562 = vmatpush.msra.mxu0 0.0
        %563 = vmatpush.msra.mxu0 0.0
        %564 = vmatpush.msra.mxu0 0.0
        %v565 = vand.u32 %v255, 4294901760
        %566 = vmatpush.msra.mxu0 %v565
        %v567 = vand.u32 %v253, 4294901760
        %568 = vmatpush.msra.mxu0 %v567
        %v569 = vand.u32 %v251, 4294901760
        %570 = vmatpush.msra.mxu0 %v569
        %v571 = vand.u32 %v249, 4294901760
        %572 = vmatpush.msra.mxu0 %v571
        %v573 = vand.u32 %v247, 4294901760
        %574 = vmatpush.msra.mxu0 %v573
        %v575 = vand.u32 %v245, 4294901760
        %576 = vmatpush.msra.mxu0 %v575
        %v577 = vand.u32 %v243, 4294901760
        %578 = vmatpush.msra.mxu0 %v577
        %v579 = vand.u32 %v241, 4294901760
        %580 = vmatpush.msra.mxu0 %v579
        %v581 = vand.u32 %v239, 4294901760
        %582 = vmatpush.msra.mxu0 %v581
        %v583 = vand.u32 %v237, 4294901760
        %584 = vmatpush.msra.mxu0 %v583
        %v585 = vand.u32 %v235, 4294901760
        %586 = vmatpush.msra.mxu0 %v585
        %v587 = vand.u32 %v233, 4294901760
        %588 = vmatpush.msra.mxu0 %v587
        %v589 = vand.u32 %v295, 4294901760
        %v590 = vsub.f32 %v295, %v589
        %v591 = vand.u32 %v590, 4294901760
        %592 = vmatmul.f32.gmra.mxu0 %v591
        %v593 = vpop.f32.mrf.mxu0
        %v594 = vadd.f32 %v534, %v593
        %v595 = vand.u32 %v298, 4294901760
        %v596 = vsub.f32 %v298, %v595
        %v597 = vand.u32 %v596, 4294901760
        %598 = vmatmul.f32.gmra.mxu0 %v597
        %v599 = vpop.f32.mrf.mxu0
        %v600 = vadd.f32 %v539, %v599
        %v601 = vand.u32 %v301, 4294901760
        %v602 = vsub.f32 %v301, %v601
        %v603 = vand.u32 %v602, 4294901760
        %604 = vmatmul.f32.gmra.mxu0 %v603
        %v605 = vpop.f32.mrf.mxu0
        %v606 = vadd.f32 %v544, %v605
        %v607 = vand.u32 %v304, 4294901760
        %v608 = vsub.f32 %v304, %v607
        %v609 = vand.u32 %v608, 4294901760
        %610 = vmatmul.f32.gmra.mxu0 %v609
        %v611 = vpop.f32.mrf.mxu0
        %v612 = vadd.f32 %v549, %v611
        %v613 = vand.u32 %v307, 4294901760
        %v614 = vsub.f32 %v307, %v613
        %v615 = vand.u32 %v614, 4294901760
        %616 = vmatmul.f32.gmra.mxu0 %v615
        %v617 = vpop.f32.mrf.mxu0
        %v618 = vadd.f32 %v554, %v617
        %v619 = vand.u32 %v310, 4294901760
        %v620 = vsub.f32 %v310, %v619
        %v621 = vand.u32 %v620, 4294901760
        %622 = vmatmul.f32.gmra.mxu0 %v621
        %v623 = vpop.f32.mrf.mxu0
        %v624 = vadd.f32 %v559, %v623
        %625 = vdwg.mxu0
        %626 = vmatpush.msra.mxu0 0.0
        %627 = vmatpush.msra.mxu0 0.0
        %628 = vmatpush.msra.mxu0 0.0
        %629 = vmatpush.msra.mxu0 0.0
        %v630 = vand.u32 %v255, 4294901760
        %v631 = vsub.f32 %v255, %v630
        %v632 = vand.u32 %v631, 4294901760
        %633 = vmatpush.msra.mxu0 %v632
        %v634 = vand.u32 %v253, 4294901760
        %v635 = vsub.f32 %v253, %v634
        %v636 = vand.u32 %v635, 4294901760
        %637 = vmatpush.msra.mxu0 %v636
        %v638 = vand.u32 %v251, 4294901760
        %v639 = vsub.f32 %v251, %v638
        %v640 = vand.u32 %v639, 4294901760
        %641 = vmatpush.msra.mxu0 %v640
        %v642 = vand.u32 %v249, 4294901760
        %v643 = vsub.f32 %v249, %v642
        %v644 = vand.u32 %v643, 4294901760
        %645 = vmatpush.msra.mxu0 %v644
        %v646 = vand.u32 %v247, 4294901760
        %v647 = vsub.f32 %v247, %v646
        %v648 = vand.u32 %v647, 4294901760
        %649 = vmatpush.msra.mxu0 %v648
        %v650 = vand.u32 %v245, 4294901760
        %v651 = vsub.f32 %v245, %v650
        %v652 = vand.u32 %v651, 4294901760
        %653 = vmatpush.msra.mxu0 %v652
        %v654 = vand.u32 %v243, 4294901760
        %v655 = vsub.f32 %v243, %v654
        %v656 = vand.u32 %v655, 4294901760
        %657 = vmatpush.msra.mxu0 %v656
        %v658 = vand.u32 %v241, 4294901760
        %v659 = vsub.f32 %v241, %v658
        %v660 = vand.u32 %v659, 4294901760
        %661 = vmatpush.msra.mxu0 %v660
        %v662 = vand.u32 %v239, 4294901760
        %v663 = vsub.f32 %v239, %v662
        %v664 = vand.u32 %v663, 4294901760
        %665 = vmatpush.msra.mxu0 %v664
        %v666 = vand.u32 %v237, 4294901760
        %v667 = vsub.f32 %v237, %v666
        %v668 = vand.u32 %v667, 4294901760
        %669 = vmatpush.msra.mxu0 %v668
        %v670 = vand.u32 %v235, 4294901760
        %v671 = vsub.f32 %v235, %v670
        %v672 = vand.u32 %v671, 4294901760
        %673 = vmatpush.msra.mxu0 %v672
        %v674 = vand.u32 %v233, 4294901760
        %v675 = vsub.f32 %v233, %v674
        %v676 = vand.u32 %v675, 4294901760
        %677 = vmatpush.msra.mxu0 %v676
        %v678 = vand.u32 %v295, 4294901760
        %679 = vmatmul.f32.gmra.mxu0 %v678
        %v680 = vpop.f32.mrf.mxu0
        %v681 = vadd.f32 %v594, %v680
        %v682 = vand.u32 %v298, 4294901760
        %683 = vmatmul.f32.gmra.mxu0 %v682
        %v684 = vpop.f32.mrf.mxu0
        %v685 = vadd.f32 %v600, %v684
        %v686 = vand.u32 %v301, 4294901760
        %687 = vmatmul.f32.gmra.mxu0 %v686
        %v688 = vpop.f32.mrf.mxu0
        %v689 = vadd.f32 %v606, %v688
        %v690 = vand.u32 %v304, 4294901760
        %691 = vmatmul.f32.gmra.mxu0 %v690
        %v692 = vpop.f32.mrf.mxu0
        %v693 = vadd.f32 %v612, %v692
        %v694 = vand.u32 %v307, 4294901760
        %695 = vmatmul.f32.gmra.mxu0 %v694
        %v696 = vpop.f32.mrf.mxu0
        %v697 = vadd.f32 %v618, %v696
        %v698 = vand.u32 %v310, 4294901760
        %699 = vmatmul.f32.gmra.mxu0 %v698
        %v700 = vpop.f32.mrf.mxu0
        %v701 = vadd.f32 %v624, %v700
        %702 = vdwg.mxu0
        %703 = vmatpush.msra.mxu0 0.0
        %704 = vmatpush.msra.mxu0 0.0
        %705 = vmatpush.msra.mxu0 0.0
        %706 = vmatpush.msra.mxu0 0.0
        %v707 = vand.u32 %v255, 4294901760
        %708 = vmatpush.msra.mxu0 %v707
        %v709 = vand.u32 %v253, 4294901760
        %710 = vmatpush.msra.mxu0 %v709
        %v711 = vand.u32 %v251, 4294901760
        %712 = vmatpush.msra.mxu0 %v711
        %v713 = vand.u32 %v249, 4294901760
        %714 = vmatpush.msra.mxu0 %v713
        %v715 = vand.u32 %v247, 4294901760
        %716 = vmatpush.msra.mxu0 %v715
        %v717 = vand.u32 %v245, 4294901760
        %718 = vmatpush.msra.mxu0 %v717
        %v719 = vand.u32 %v243, 4294901760
        %720 = vmatpush.msra.mxu0 %v719
        %v721 = vand.u32 %v241, 4294901760
        %722 = vmatpush.msra.mxu0 %v721
        %v723 = vand.u32 %v239, 4294901760
        %724 = vmatpush.msra.mxu0 %v723
        %v725 = vand.u32 %v237, 4294901760
        %726 = vmatpush.msra.mxu0 %v725
        %v727 = vand.u32 %v235, 4294901760
        %728 = vmatpush.msra.mxu0 %v727
        %v729 = vand.u32 %v233, 4294901760
        %730 = vmatpush.msra.mxu0 %v729
        %v731 = vand.u32 %v295, 4294901760
        %732 = vmatmul.f32.gmra.mxu0 %v731
        %v733 = vpop.f32.mrf.mxu0
        %v734 = vadd.f32 %v681, %v733
        %v735 = vand.u32 %v298, 4294901760
        %736 = vmatmul.f32.gmra.mxu0 %v735
        %v737 = vpop.f32.mrf.mxu0
        %v738 = vadd.f32 %v685, %v737
        %v739 = vand.u32 %v301, 4294901760
        %740 = vmatmul.f32.gmra.mxu0 %v739
        %v741 = vpop.f32.mrf.mxu0
        %v742 = vadd.f32 %v689, %v741
        %v743 = vand.u32 %v304, 4294901760
        %744 = vmatmul.f32.gmra.mxu0 %v743
        %v745 = vpop.f32.mrf.mxu0
        %v746 = vadd.f32 %v693, %v745
        %v747 = vand.u32 %v307, 4294901760
        %748 = vmatmul.f32.gmra.mxu0 %v747
        %v749 = vpop.f32.mrf.mxu0
        %v750 = vadd.f32 %v697, %v749
        %v751 = vand.u32 %v310, 4294901760
        %752 = vmatmul.f32.gmra.mxu0 %v751
        %v753 = vpop.f32.mrf.mxu0
        %v754 = vadd.f32 %v701, %v753
        %755 = vdwg.mxu0
        %756 = vmatpush.msra.mxu0 0.0
        %757 = vmatpush.msra.mxu0 0.0
        %758 = vmatpush.msra.mxu0 0.0
        %759 = vmatpush.msra.mxu0 0.0
        %v760 = vand.u32 %v256, 4294901760
        %761 = vmatpush.msra.mxu0 %v760
        %v762 = vand.u32 %v254, 4294901760
        %763 = vmatpush.msra.mxu0 %v762
        %v764 = vand.u32 %v252, 4294901760
        %765 = vmatpush.msra.mxu0 %v764
        %v766 = vand.u32 %v250, 4294901760
        %767 = vmatpush.msra.mxu0 %v766
        %v768 = vand.u32 %v248, 4294901760
        %769 = vmatpush.msra.mxu0 %v768
        %v770 = vand.u32 %v246, 4294901760
        %771 = vmatpush.msra.mxu0 %v770
        %v772 = vand.u32 %v244, 4294901760
        %773 = vmatpush.msra.mxu0 %v772
        %v774 = vand.u32 %v242, 4294901760
        %775 = vmatpush.msra.mxu0 %v774
        %v776 = vand.u32 %v240, 4294901760
        %777 = vmatpush.msra.mxu0 %v776
        %v778 = vand.u32 %v238, 4294901760
        %779 = vmatpush.msra.mxu0 %v778
        %v780 = vand.u32 %v236, 4294901760
        %781 = vmatpush.msra.mxu0 %v780
        %v782 = vand.u32 %v234, 4294901760
        %783 = vmatpush.msra.mxu0 %v782
        %v784 = vand.u32 %v295, 4294901760
        %v785 = vsub.f32 %v295, %v784
        %v786 = vand.u32 %v785, 4294901760
        %v787 = vsub.f32 %v785, %v786
        %v788 = vand.u32 %v787, 4294901760
        %789 = vmatmul.f32.gmra.mxu0 %v788
        %v790 = vpop.f32.mrf.mxu0
        %v791 = vadd.f32 %v266, %v790
        %v792 = vand.u32 %v298, 4294901760
        %v793 = vsub.f32 %v298, %v792
        %v794 = vand.u32 %v793, 4294901760
        %v795 = vsub.f32 %v793, %v794
        %v796 = vand.u32 %v795, 4294901760
        %797 = vmatmul.f32.gmra.mxu0 %v796
        %v798 = vpop.f32.mrf.mxu0
        %v799 = vadd.f32 %v271, %v798
        %v800 = vand.u32 %v301, 4294901760
        %v801 = vsub.f32 %v301, %v800
        %v802 = vand.u32 %v801, 4294901760
        %v803 = vsub.f32 %v801, %v802
        %v804 = vand.u32 %v803, 4294901760
        %805 = vmatmul.f32.gmra.mxu0 %v804
        %v806 = vpop.f32.mrf.mxu0
        %v807 = vadd.f32 %v276, %v806
        %v808 = vand.u32 %v304, 4294901760
        %v809 = vsub.f32 %v304, %v808
        %v810 = vand.u32 %v809, 4294901760
        %v811 = vsub.f32 %v809, %v810
        %v812 = vand.u32 %v811, 4294901760
        %813 = vmatmul.f32.gmra.mxu0 %v812
        %v814 = vpop.f32.mrf.mxu0
        %v815 = vadd.f32 %v281, %v814
        %v816 = vand.u32 %v307, 4294901760
        %v817 = vsub.f32 %v307, %v816
        %v818 = vand.u32 %v817, 4294901760
        %v819 = vsub.f32 %v817, %v818
        %v820 = vand.u32 %v819, 4294901760
        %821 = vmatmul.f32.gmra.mxu0 %v820
        %v822 = vpop.f32.mrf.mxu0
        %v823 = vadd.f32 %v286, %v822
        %v824 = vand.u32 %v310, 4294901760
        %v825 = vsub.f32 %v310, %v824
        %v826 = vand.u32 %v825, 4294901760
        %v827 = vsub.f32 %v825, %v826
        %v828 = vand.u32 %v827, 4294901760
        %829 = vmatmul.f32.gmra.mxu0 %v828
        %v830 = vpop.f32.mrf.mxu0
        %v831 = vadd.f32 %v291, %v830
        %832 = vdwg.mxu0
        %833 = vmatpush.msra.mxu0 0.0
        %834 = vmatpush.msra.mxu0 0.0
        %835 = vmatpush.msra.mxu0 0.0
        %836 = vmatpush.msra.mxu0 0.0
        %v837 = vand.u32 %v256, 4294901760
        %v838 = vsub.f32 %v256, %v837
        %v839 = vand.u32 %v838, 4294901760
        %v840 = vsub.f32 %v838, %v839
        %v841 = vand.u32 %v840, 4294901760
        %842 = vmatpush.msra.mxu0 %v841
        %v843 = vand.u32 %v254, 4294901760
        %v844 = vsub.f32 %v254, %v843
        %v845 = vand.u32 %v844, 4294901760
        %v846 = vsub.f32 %v844, %v845
        %v847 = vand.u32 %v846, 4294901760
        %848 = vmatpush.msra.mxu0 %v847
        %v849 = vand.u32 %v252, 4294901760
        %v850 = vsub.f32 %v252, %v849
        %v851 = vand.u32 %v850, 4294901760
        %v852 = vsub.f32 %v850, %v851
        %v853 = vand.u32 %v852, 4294901760
        %854 = vmatpush.msra.mxu0 %v853
        %v855 = vand.u32 %v250, 4294901760
        %v856 = vsub.f32 %v250, %v855
        %v857 = vand.u32 %v856, 4294901760
        %v858 = vsub.f32 %v856, %v857
        %v859 = vand.u32 %v858, 4294901760
        %860 = vmatpush.msra.mxu0 %v859
        %v861 = vand.u32 %v248, 4294901760
        %v862 = vsub.f32 %v248, %v861
        %v863 = vand.u32 %v862, 4294901760
        %v864 = vsub.f32 %v862, %v863
        %v865 = vand.u32 %v864, 4294901760
        %866 = vmatpush.msra.mxu0 %v865
        %v867 = vand.u32 %v246, 4294901760
        %v868 = vsub.f32 %v246, %v867
        %v869 = vand.u32 %v868, 4294901760
        %v870 = vsub.f32 %v868, %v869
        %v871 = vand.u32 %v870, 4294901760
        %872 = vmatpush.msra.mxu0 %v871
        %v873 = vand.u32 %v244, 4294901760
        %v874 = vsub.f32 %v244, %v873
        %v875 = vand.u32 %v874, 4294901760
        %v876 = vsub.f32 %v874, %v875
        %v877 = vand.u32 %v876, 4294901760
        %878 = vmatpush.msra.mxu0 %v877
        %v879 = vand.u32 %v242, 4294901760
        %v880 = vsub.f32 %v242, %v879
        %v881 = vand.u32 %v880, 4294901760
        %v882 = vsub.f32 %v880, %v881
        %v883 = vand.u32 %v882, 4294901760
        %884 = vmatpush.msra.mxu0 %v883
        %v885 = vand.u32 %v240, 4294901760
        %v886 = vsub.f32 %v240, %v885
        %v887 = vand.u32 %v886, 4294901760
        %v888 = vsub.f32 %v886, %v887
        %v889 = vand.u32 %v888, 4294901760
        %890 = vmatpush.msra.mxu0 %v889
        %v891 = vand.u32 %v238, 4294901760
        %v892 = vsub.f32 %v238, %v891
        %v893 = vand.u32 %v892, 4294901760
        %v894 = vsub.f32 %v892, %v893
        %v895 = vand.u32 %v894, 4294901760
        %896 = vmatpush.msra.mxu0 %v895
        %v897 = vand.u32 %v236, 4294901760
        %v898 = vsub.f32 %v236, %v897
        %v899 = vand.u32 %v898, 4294901760
        %v900 = vsub.f32 %v898, %v899
        %v901 = vand.u32 %v900, 4294901760
        %902 = vmatpush.msra.mxu0 %v901
        %v903 = vand.u32 %v234, 4294901760
        %v904 = vsub.f32 %v234, %v903
        %v905 = vand.u32 %v904, 4294901760
        %v906 = vsub.f32 %v904, %v905
        %v907 = vand.u32 %v906, 4294901760
        %908 = vmatpush.msra.mxu0 %v907
        %v909 = vand.u32 %v295, 4294901760
        %910 = vmatmul.f32.gmra.mxu0 %v909
        %v911 = vpop.f32.mrf.mxu0
        %v912 = vadd.f32 %v791, %v911
        %v913 = vand.u32 %v298, 4294901760
        %914 = vmatmul.f32.gmra.mxu0 %v913
        %v915 = vpop.f32.mrf.mxu0
        %v916 = vadd.f32 %v799, %v915
        %v917 = vand.u32 %v301, 4294901760
        %918 = vmatmul.f32.gmra.mxu0 %v917
        %v919 = vpop.f32.mrf.mxu0
        %v920 = vadd.f32 %v807, %v919
        %v921 = vand.u32 %v304, 4294901760
        %922 = vmatmul.f32.gmra.mxu0 %v921
        %v923 = vpop.f32.mrf.mxu0
        %v924 = vadd.f32 %v815, %v923
        %v925 = vand.u32 %v307, 4294901760
        %926 = vmatmul.f32.gmra.mxu0 %v925
        %v927 = vpop.f32.mrf.mxu0
        %v928 = vadd.f32 %v823, %v927
        %v929 = vand.u32 %v310, 4294901760
        %930 = vmatmul.f32.gmra.mxu0 %v929
        %v931 = vpop.f32.mrf.mxu0
        %v932 = vadd.f32 %v831, %v931
        %933 = vdwg.mxu0
        %934 = vmatpush.msra.mxu0 0.0
        %935 = vmatpush.msra.mxu0 0.0
        %936 = vmatpush.msra.mxu0 0.0
        %937 = vmatpush.msra.mxu0 0.0
        %v938 = vand.u32 %v256, 4294901760
        %v939 = vsub.f32 %v256, %v938
        %940 = vmatpush.msra.mxu0 %v939
        %v941 = vand.u32 %v254, 4294901760
        %v942 = vsub.f32 %v254, %v941
        %943 = vmatpush.msra.mxu0 %v942
        %v944 = vand.u32 %v252, 4294901760
        %v945 = vsub.f32 %v252, %v944
        %946 = vmatpush.msra.mxu0 %v945
        %v947 = vand.u32 %v250, 4294901760
        %v948 = vsub.f32 %v250, %v947
        %949 = vmatpush.msra.mxu0 %v948
        %v950 = vand.u32 %v248, 4294901760
        %v951 = vsub.f32 %v248, %v950
        %952 = vmatpush.msra.mxu0 %v951
        %v953 = vand.u32 %v246, 4294901760
        %v954 = vsub.f32 %v246, %v953
        %955 = vmatpush.msra.mxu0 %v954
        %v956 = vand.u32 %v244, 4294901760
        %v957 = vsub.f32 %v244, %v956
        %958 = vmatpush.msra.mxu0 %v957
        %v959 = vand.u32 %v242, 4294901760
        %v960 = vsub.f32 %v242, %v959
        %961 = vmatpush.msra.mxu0 %v960
        %v962 = vand.u32 %v240, 4294901760
        %v963 = vsub.f32 %v240, %v962
        %964 = vmatpush.msra.mxu0 %v963
        %v965 = vand.u32 %v238, 4294901760
        %v966 = vsub.f32 %v238, %v965
        %967 = vmatpush.msra.mxu0 %v966
        %v968 = vand.u32 %v236, 4294901760
        %v969 = vsub.f32 %v236, %v968
        %970 = vmatpush.msra.mxu0 %v969
        %v971 = vand.u32 %v234, 4294901760
        %v972 = vsub.f32 %v234, %v971
        %973 = vmatpush.msra.mxu0 %v972
        %v974 = vand.u32 %v295, 4294901760
        %v975 = vsub.f32 %v295, %v974
        %976 = vmatmul.f32.gmra.mxu0 %v975
        %v977 = vpop.f32.mrf.mxu0
        %v978 = vadd.f32 %v912, %v977
        %v979 = vand.u32 %v298, 4294901760
        %v980 = vsub.f32 %v298, %v979
        %981 = vmatmul.f32.gmra.mxu0 %v980
        %v982 = vpop.f32.mrf.mxu0
        %v983 = vadd.f32 %v916, %v982
        %v984 = vand.u32 %v301, 4294901760
        %v985 = vsub.f32 %v301, %v984
        %986 = vmatmul.f32.gmra.mxu0 %v985
        %v987 = vpop.f32.mrf.mxu0
        %v988 = vadd.f32 %v920, %v987
        %v989 = vand.u32 %v304, 4294901760
        %v990 = vsub.f32 %v304, %v989
        %991 = vmatmul.f32.gmra.mxu0 %v990
        %v992 = vpop.f32.mrf.mxu0
        %v993 = vadd.f32 %v924, %v992
        %v994 = vand.u32 %v307, 4294901760
        %v995 = vsub.f32 %v307, %v994
        %996 = vmatmul.f32.gmra.mxu0 %v995
        %v997 = vpop.f32.mrf.mxu0
        %v998 = vadd.f32 %v928, %v997
        %v999 = vand.u32 %v310, 4294901760
        %v1000 = vsub.f32 %v310, %v999
        %1001 = vmatmul.f32.gmra.mxu0 %v1000
        %v1002 = vpop.f32.mrf.mxu0
        %v1003 = vadd.f32 %v932, %v1002
        %1004 = vdwg.mxu0
        %1005 = vmatpush.msra.mxu0 0.0
        %1006 = vmatpush.msra.mxu0 0.0
        %1007 = vmatpush.msra.mxu0 0.0
        %1008 = vmatpush.msra.mxu0 0.0
        %v1009 = vand.u32 %v256, 4294901760
        %1010 = vmatpush.msra.mxu0 %v1009
        %v1011 = vand.u32 %v254, 4294901760
        %1012 = vmatpush.msra.mxu0 %v1011
        %v1013 = vand.u32 %v252, 4294901760
        %1014 = vmatpush.msra.mxu0 %v1013
        %v1015 = vand.u32 %v250, 4294901760
        %1016 = vmatpush.msra.mxu0 %v1015
        %v1017 = vand.u32 %v248, 4294901760
        %1018 = vmatpush.msra.mxu0 %v1017
        %v1019 = vand.u32 %v246, 4294901760
        %1020 = vmatpush.msra.mxu0 %v1019
        %v1021 = vand.u32 %v244, 4294901760
        %1022 = vmatpush.msra.mxu0 %v1021
        %v1023 = vand.u32 %v242, 4294901760
        %1024 = vmatpush.msra.mxu0 %v1023
        %v1025 = vand.u32 %v240, 4294901760
        %1026 = vmatpush.msra.mxu0 %v1025
        %v1027 = vand.u32 %v238, 4294901760
        %1028 = vmatpush.msra.mxu0 %v1027
        %v1029 = vand.u32 %v236, 4294901760
        %1030 = vmatpush.msra.mxu0 %v1029
        %v1031 = vand.u32 %v234, 4294901760
        %1032 = vmatpush.msra.mxu0 %v1031
        %v1033 = vand.u32 %v295, 4294901760
        %v1034 = vsub.f32 %v295, %v1033
        %v1035 = vand.u32 %v1034, 4294901760
        %1036 = vmatmul.f32.gmra.mxu0 %v1035
        %v1037 = vpop.f32.mrf.mxu0
        %v1038 = vadd.f32 %v978, %v1037
        %v1039 = vand.u32 %v298, 4294901760
        %v1040 = vsub.f32 %v298, %v1039
        %v1041 = vand.u32 %v1040, 4294901760
        %1042 = vmatmul.f32.gmra.mxu0 %v1041
        %v1043 = vpop.f32.mrf.mxu0
        %v1044 = vadd.f32 %v983, %v1043
        %v1045 = vand.u32 %v301, 4294901760
        %v1046 = vsub.f32 %v301, %v1045
        %v1047 = vand.u32 %v1046, 4294901760
        %1048 = vmatmul.f32.gmra.mxu0 %v1047
        %v1049 = vpop.f32.mrf.mxu0
        %v1050 = vadd.f32 %v988, %v1049
        %v1051 = vand.u32 %v304, 4294901760
        %v1052 = vsub.f32 %v304, %v1051
        %v1053 = vand.u32 %v1052, 4294901760
        %1054 = vmatmul.f32.gmra.mxu0 %v1053
        %v1055 = vpop.f32.mrf.mxu0
        %v1056 = vadd.f32 %v993, %v1055
        %v1057 = vand.u32 %v307, 4294901760
        %v1058 = vsub.f32 %v307, %v1057
        %v1059 = vand.u32 %v1058, 4294901760
        %1060 = vmatmul.f32.gmra.mxu0 %v1059
        %v1061 = vpop.f32.mrf.mxu0
        %v1062 = vadd.f32 %v998, %v1061
        %v1063 = vand.u32 %v310, 4294901760
        %v1064 = vsub.f32 %v310, %v1063
        %v1065 = vand.u32 %v1064, 4294901760
        %1066 = vmatmul.f32.gmra.mxu0 %v1065
        %v1067 = vpop.f32.mrf.mxu0
        %v1068 = vadd.f32 %v1003, %v1067
        %1069 = vdwg.mxu0
        %1070 = vmatpush.msra.mxu0 0.0
        %1071 = vmatpush.msra.mxu0 0.0
        %1072 = vmatpush.msra.mxu0 0.0
        %1073 = vmatpush.msra.mxu0 0.0
        %v1074 = vand.u32 %v256, 4294901760
        %v1075 = vsub.f32 %v256, %v1074
        %v1076 = vand.u32 %v1075, 4294901760
        %1077 = vmatpush.msra.mxu0 %v1076
        %v1078 = vand.u32 %v254, 4294901760
        %v1079 = vsub.f32 %v254, %v1078
        %v1080 = vand.u32 %v1079, 4294901760
        %1081 = vmatpush.msra.mxu0 %v1080
        %v1082 = vand.u32 %v252, 4294901760
        %v1083 = vsub.f32 %v252, %v1082
        %v1084 = vand.u32 %v1083, 4294901760
        %1085 = vmatpush.msra.mxu0 %v1084
        %v1086 = vand.u32 %v250, 4294901760
        %v1087 = vsub.f32 %v250, %v1086
        %v1088 = vand.u32 %v1087, 4294901760
        %1089 = vmatpush.msra.mxu0 %v1088
        %v1090 = vand.u32 %v248, 4294901760
        %v1091 = vsub.f32 %v248, %v1090
        %v1092 = vand.u32 %v1091, 4294901760
        %1093 = vmatpush.msra.mxu0 %v1092
        %v1094 = vand.u32 %v246, 4294901760
        %v1095 = vsub.f32 %v246, %v1094
        %v1096 = vand.u32 %v1095, 4294901760
        %1097 = vmatpush.msra.mxu0 %v1096
        %v1098 = vand.u32 %v244, 4294901760
        %v1099 = vsub.f32 %v244, %v1098
        %v1100 = vand.u32 %v1099, 4294901760
        %1101 = vmatpush.msra.mxu0 %v1100
        %v1102 = vand.u32 %v242, 4294901760
        %v1103 = vsub.f32 %v242, %v1102
        %v1104 = vand.u32 %v1103, 4294901760
        %1105 = vmatpush.msra.mxu0 %v1104
        %v1106 = vand.u32 %v240, 4294901760
        %v1107 = vsub.f32 %v240, %v1106
        %v1108 = vand.u32 %v1107, 4294901760
        %1109 = vmatpush.msra.mxu0 %v1108
        %v1110 = vand.u32 %v238, 4294901760
        %v1111 = vsub.f32 %v238, %v1110
        %v1112 = vand.u32 %v1111, 4294901760
        %1113 = vmatpush.msra.mxu0 %v1112
        %v1114 = vand.u32 %v236, 4294901760
        %v1115 = vsub.f32 %v236, %v1114
        %v1116 = vand.u32 %v1115, 4294901760
        %1117 = vmatpush.msra.mxu0 %v1116
        %v1118 = vand.u32 %v234, 4294901760
        %v1119 = vsub.f32 %v234, %v1118
        %v1120 = vand.u32 %v1119, 4294901760
        %1121 = vmatpush.msra.mxu0 %v1120
        %v1122 = vand.u32 %v295, 4294901760
        %1123 = vmatmul.f32.gmra.mxu0 %v1122
        %v1124 = vpop.f32.mrf.mxu0
        %v1125 = vadd.f32 %v1038, %v1124
        %v1126 = vand.u32 %v298, 4294901760
        %1127 = vmatmul.f32.gmra.mxu0 %v1126
        %v1128 = vpop.f32.mrf.mxu0
        %v1129 = vadd.f32 %v1044, %v1128
        %v1130 = vand.u32 %v301, 4294901760
        %1131 = vmatmul.f32.gmra.mxu0 %v1130
        %v1132 = vpop.f32.mrf.mxu0
        %v1133 = vadd.f32 %v1050, %v1132
        %v1134 = vand.u32 %v304, 4294901760
        %1135 = vmatmul.f32.gmra.mxu0 %v1134
        %v1136 = vpop.f32.mrf.mxu0
        %v1137 = vadd.f32 %v1056, %v1136
        %v1138 = vand.u32 %v307, 4294901760
        %1139 = vmatmul.f32.gmra.mxu0 %v1138
        %v1140 = vpop.f32.mrf.mxu0
        %v1141 = vadd.f32 %v1062, %v1140
        %v1142 = vand.u32 %v310, 4294901760
        %1143 = vmatmul.f32.gmra.mxu0 %v1142
        %v1144 = vpop.f32.mrf.mxu0
        %v1145 = vadd.f32 %v1068, %v1144
        %1146 = vdwg.mxu0
        %1147 = vmatpush.msra.mxu0 0.0
        %1148 = vmatpush.msra.mxu0 0.0
        %1149 = vmatpush.msra.mxu0 0.0
        %1150 = vmatpush.msra.mxu0 0.0
        %v1151 = vand.u32 %v256, 4294901760
        %1152 = vmatpush.msra.mxu0 %v1151
        %v1153 = vand.u32 %v254, 4294901760
        %1154 = vmatpush.msra.mxu0 %v1153
        %v1155 = vand.u32 %v252, 4294901760
        %1156 = vmatpush.msra.mxu0 %v1155
        %v1157 = vand.u32 %v250, 4294901760
        %1158 = vmatpush.msra.mxu0 %v1157
        %v1159 = vand.u32 %v248, 4294901760
        %1160 = vmatpush.msra.mxu0 %v1159
        %v1161 = vand.u32 %v246, 4294901760
        %1162 = vmatpush.msra.mxu0 %v1161
        %v1163 = vand.u32 %v244, 4294901760
        %1164 = vmatpush.msra.mxu0 %v1163
        %v1165 = vand.u32 %v242, 4294901760
        %1166 = vmatpush.msra.mxu0 %v1165
        %v1167 = vand.u32 %v240, 4294901760
        %1168 = vmatpush.msra.mxu0 %v1167
        %v1169 = vand.u32 %v238, 4294901760
        %1170 = vmatpush.msra.mxu0 %v1169
        %v1171 = vand.u32 %v236, 4294901760
        %1172 = vmatpush.msra.mxu0 %v1171
        %v1173 = vand.u32 %v234, 4294901760
        %1174 = vmatpush.msra.mxu0 %v1173
        %v1175 = vand.u32 %v295, 4294901760
        %1176 = vmatmul.f32.gmra.mxu0 %v1175
        %v1177 = vpop.f32.mrf.mxu0
        %v1178 = vadd.f32 %v1125, %v1177
        %v1179 = vand.u32 %v298, 4294901760
        %1180 = vmatmul.f32.gmra.mxu0 %v1179
        %v1181 = vpop.f32.mrf.mxu0
        %v1182 = vadd.f32 %v1129, %v1181
        %v1183 = vand.u32 %v301, 4294901760
        %1184 = vmatmul.f32.gmra.mxu0 %v1183
        %v1185 = vpop.f32.mrf.mxu0
        %v1186 = vadd.f32 %v1133, %v1185
        %v1187 = vand.u32 %v304, 4294901760
        %1188 = vmatmul.f32.gmra.mxu0 %v1187
        %v1189 = vpop.f32.mrf.mxu0
        %v1190 = vadd.f32 %v1137, %v1189
        %v1191 = vand.u32 %v307, 4294901760
        %1192 = vmatmul.f32.gmra.mxu0 %v1191
        %v1193 = vpop.f32.mrf.mxu0
        %v1194 = vadd.f32 %v1141, %v1193
        %v1195 = vand.u32 %v310, 4294901760
        %1196 = vmatmul.f32.gmra.mxu0 %v1195
        %v1197 = vpop.f32.mrf.mxu0
        %v1198 = vadd.f32 %v1145, %v1197
        %1199 = vdwg.mxu0
        %1200 = vst [vmem:[%s225] sm:$0xff] %v734
        %1201 = vst [vmem:[%s225 + $0x8] sm:$0xff] %v1178
        %1202 = vst [vmem:[%s225 + $0x10] sm:$0xff] %v738
        %1203 = vst [vmem:[%s225 + $0x18] sm:$0xff] %v1182
        %1204 = vst [vmem:[%s225 + $0x20] sm:$0xff] %v742
        %1205 = vst [vmem:[%s225 + $0x28] sm:$0xff] %v1186
        %1206 = vst [vmem:[%s225 + $0x30] sm:$0xff] %v746
        %1207 = vst [vmem:[%s225 + $0x38] sm:$0xff] %v1190
        %1208 = vst [vmem:[%s225 + $0x40] sm:$0xff] %v750
        %1209 = vst [vmem:[%s225 + $0x48] sm:$0xff] %v1194
        %1210 = vst [vmem:[%s225 + $0x50] sm:$0xff] %v754
        %1211 = vst [vmem:[%s225 + $0x58] sm:$0xff] %v1198
        %s1212 = smul.u32 2, %s20
        %p1213 = scmp.lt.s32.totalorder %s19, 1
        %s1214 = scalar_select %p1213, %s19, 1
        %p1215 = scmp.lt.s32.totalorder %s1212, 1
        %s1216 = scalar_select %p1215, %s1212, 1
        %s1217 = smul.addr %s1214, 12
        %s1218 = sadd.s32 %s1216, %s1217
        %s1219 = smul.addr %s1218, 8
        %s1220 = scalar_lea.vmem %s3, %s1219
        // Predicated region
        $region37: #{patch_unembed_forward.1} parent=31 // pred_check
          %p1221 = pneg %p117
        $region38: #{patch_unembed_forward.1} parent=31 // pred_check_branch
          %1223 = sbr.rel (%p1221) target = $region40
        $region39: #{patch_unembed_forward.1} parent=31 // pred_region
          %s1224 = smul.u32 2, %s20
        $region40: #{patch_unembed_forward.1} parent=31 // pred_fallthru
          _
      $region32: #{patch_unembed_forward.1} parent=5 // pred_fallthru
        _
      %p1225 = scmp.le.s32.totalorder 2, %s10
      // Predicated region
      $region41: #{patch_unembed_forward.1} parent=5 // pred_check
        %p1226 = pneg %p1225
      $region42: #{patch_unembed_forward.1} parent=5 // pred_check_branch
        %1228 = sbr.rel (%p1226) target = $region44
      $region43: #{patch_unembed_forward.1} parent=5 // pred_region
        %s1229 = ssub.s32 %s10, 2
        // Predicated region
        $region45: #{patch_unembed_forward.1} parent=43 // pred_check
          %p1230 = pneg %p123
        $region46: #{patch_unembed_forward.1} parent=43 // pred_check_branch
          %1232 = sbr.rel (%p1230) target = $region48
        $region47: #{patch_unembed_forward.1} parent=43 // pred_region
          %s1233 = smul.u32 2, %s22
          %p1234 = scmp.lt.s32.totalorder %s21, 1
          %s1235 = scalar_select %p1234, %s21, 1
          %p1236 = scmp.lt.s32.totalorder %s1233, 1
          %s1237 = scalar_select %p1236, %s1233, 1
          %s1238 = smul.addr %s1235, 12
          %s1239 = sadd.s32 %s1237, %s1238
          %s1240 = smul.addr %s1239, 8
          %s1241 = scalar_lea.vmem %s3, %s1240
        $region48: #{patch_unembed_forward.1} parent=43 // pred_fallthru
          _
      $region44: #{patch_unembed_forward.1} parent=5 // pred_fallthru
        _
    $region6: #{patch_unembed_forward.1} parent=1 // loop_footer
      %s14 = sadd.s32 1, %s10
    $region7: #{patch_unembed_forward.1} parent=1 // loop_footer_branch
      %9 = sbr.rel target = $region3
    $region8: #{patch_unembed_forward.1} parent=1 // loop_exit
      _
    %1242 = vsyncpa [#allocation3], 1
    %s1243 = scalar_lea.sflag [#allocation3], 1
    %1244 = vsyncpa %s1243, 1

</llo_original>
